<compile_context>
chip_gen: v7x
topology: tpu7x:2x2x1
jax: 0.10.0
libtpu: 0.0.40
codegen_flags: <defaults>
</compile_context>

<pallas_src>
import jax
import jax.numpy as jnp
from jax import lax
from jax.experimental import pallas as pl
from jax.experimental.pallas import tpu as pltpu


def mlp_kernel(x_ref, w1t_ref, b1_ref, w2_ref, b2_ref, o_ref):
    # Layer 1, computed transposed: hT[h, b] = sum_d w1[d, h] * x[b, d].
    # dot_general contracting dim 1 of both operands (the q @ k^T pattern),
    # f32 operands with f32 accumulation on the MXU.
    ht = lax.dot_general(
        w1t_ref[...], x_ref[...],
        dimension_numbers=(((1,), (1,)), ((), ())),
        preferred_element_type=jnp.float32)               # (H, TB)
    # Bias column (H, 1) broadcasts along lanes; ReLU on the VPU.
    ht = jnp.maximum(ht + b1_ref[...], 0.0)
    # Layer 2 on the MXU: (8, H) @ (H, TB) -> (8, TB); only row 0 carries the
    # real w2 (rows 1..7 are zeros).  Result row 0 is already lane-dense
    # (batch on lanes), so no cross-lane relayout and no masked column stores.
    out8 = jnp.dot(w2_ref[...], ht, preferred_element_type=jnp.float32)
    o_ref[...] = (out8[0:1, :] + b2_ref[0, 0]).astype(o_ref.dtype)


def _round_up(a, m):
    return (a + m - 1) // m * m


def neural_net_forward(x, w1, b1, w2, b2, *, block_b=8192):
    """x: (B, D) f32, w1: (D, H), b1: (1, H), w2: (H, 1), b2: (1, 1) -> (B,) f32."""
    B, D = x.shape
    H = w1.shape[1]

    # ---- one-time, tiny weight relayouts (all f32 -> exact forward) ----
    w1t = jnp.asarray(w1, jnp.float32).T                        # (H, D)
    b1c = jnp.asarray(b1, jnp.float32).reshape(H, 1)            # (H, 1) column
    w2p = jnp.zeros((8, H), jnp.float32).at[0, :].set(
        jnp.asarray(w2, jnp.float32).reshape(H))                # (8, H), row 0 real
    b2s = jnp.asarray(b2, jnp.float32).reshape(1, 1)            # SMEM scalar
    x = jnp.asarray(x, jnp.float32)

    # ---- batch tiling: TB is a multiple of 128 (output lane dim) ----
    if B >= 256:
        # No pad / no extra HBM pass over x: the last partial tile is handled
        # by Pallas block masking.  Cap TB so the grid keeps >= 2 steps for
        # v7x's two TensorCores.
        TB = min(_round_up(block_b, 128), (B // 2 // 128) * 128)
        TB = max(TB, 128)
        Bp = B
        x_in = x
    else:
        # Tiny batch: pad up to one 128-row tile (negligible copy).
        Bp = _round_up(max(B, 1), 128)
        TB = Bp
        x_in = x if Bp == B else jnp.pad(x, ((0, Bp - B), (0, 0)))

    grid = (pl.cdiv(Bp, TB),)

    flops = 2 * Bp * D * H + 2 * Bp * H * 8
    bytes_accessed = (Bp * D * 4
                      + (w1t.size + b1c.size + w2p.size + b2s.size) * 4
                      + Bp * 4)

    out = pl.pallas_call(
        mlp_kernel,
        out_shape=jax.ShapeDtypeStruct((1, Bp), jnp.float32),
        grid=grid,
        in_specs=[
            pl.BlockSpec((TB, D), lambda i: (i, 0)),      # x: pipelined f32 batch tiles
            pl.BlockSpec((H, D), lambda i: (0, 0)),       # W1^T: VMEM-resident
            pl.BlockSpec((H, 1), lambda i: (0, 0)),       # b1 column: VMEM-resident
            pl.BlockSpec((8, H), lambda i: (0, 0)),       # w2 (row 0 real): VMEM-resident
            pl.BlockSpec(memory_space=pltpu.MemorySpace.SMEM),   # b2 scalar
        ],
        out_specs=pl.BlockSpec((1, TB), lambda i: (0, i)),       # lane-dense output row
        compiler_params=pltpu.CompilerParams(
            dimension_semantics=("parallel",),
            vmem_limit_bytes=48 * 1024 * 1024),
        cost_estimate=pl.CostEstimate(
            flops=flops, transcendentals=0, bytes_accessed=bytes_accessed),
    )(x_in, w1t, b1c, w2p, b2s)

    # PyTorch .squeeze(): (B, 1) -> (B,); drop any padded batch columns.
    return out.reshape(-1)[:B]
    # TODO(synk): if profiling at very large TB shows the resident weight
    # streams' redundant second buffers matter, mark them pipeline_mode=pl.Buffered(1).


def init_params(key, input_dim, hidden=64):
    """Deterministic init mimicking nn.Linear defaults: U(-1/sqrt(fan_in), +)."""
    k1, k2, k3, k4 = jax.random.split(key, 4)
    bound1 = 1.0 / jnp.sqrt(input_dim)
    w1 = jax.random.uniform(k1, (input_dim, hidden), jnp.float32, -bound1, bound1)
    b1 = jax.random.uniform(k2, (1, hidden), jnp.float32, -bound1, bound1)
    bound2 = 1.0 / jnp.sqrt(hidden)
    w2 = jax.random.uniform(k3, (hidden, 1), jnp.float32, -bound2, bound2)
    b2 = jax.random.uniform(k4, (1, 1), jnp.float32, -bound2, bound2)
    return w1, b1, w2, b2


if __name__ == "__main__":
    key = jax.random.PRNGKey(0)
    kx, kp = jax.random.split(key)

    B, D = 8, 32  # small batch / input_dim consistent with NeuralNet(input_dim=32)
    x = jax.random.normal(kx, (B, D), dtype=jnp.float32)
    w1, b1, w2, b2 = init_params(kp, D)

    y = neural_net_forward(x, w1, b1, w2, b2)
    y = jax.block_until_ready(y)
    assert y.shape == (B,)

    # Full-f32 reference identical to the PyTorch forward.
    h_ref = jnp.maximum(jnp.dot(x, w1, precision=lax.Precision.HIGHEST) + b1, 0.0)
    ref = jnp.squeeze(jnp.dot(h_ref, w2, precision=lax.Precision.HIGHEST) + b2, axis=-1)
    assert jnp.allclose(y, ref, atol=1e-2, rtol=1e-2), (y, ref)

    print("KERNEL_OK")
</pallas_src>

<mosaic_0001>
module attributes {stable_mosaic.version = 11 : i64} {
  func.func @mlp_kernel(%arg0: i32, %arg1: memref<128x32xf32, #tpu.memory_space<vmem>>, %arg2: memref<64x32xf32, #tpu.memory_space<vmem>>, %arg3: memref<64x1xf32, #tpu.memory_space<vmem>>, %arg4: memref<8x64xf32, #tpu.memory_space<vmem>>, %arg5: memref<1x1xf32, #tpu.memory_space<smem>>, %arg6: memref<1x128xf32, #tpu.memory_space<vmem>>) attributes {dimension_semantics = [#tpu.dimension_semantics<parallel>], iteration_bounds = array<i64: 1>, scalar_prefetch = 0 : i64, scratch_operands = 0 : i64, tpu.core_type = #tpu.core_type<tc>, window_params = [{transform_indices = @transform_0, window_bounds = array<i64: 128, 32>}, {pipeline_mode = #tpu.pipeline_mode<synchronous>, transform_indices = @transform_1, window_bounds = array<i64: 64, 32>}, {pipeline_mode = #tpu.pipeline_mode<synchronous>, transform_indices = @transform_2, window_bounds = array<i64: 64, 1>}, {pipeline_mode = #tpu.pipeline_mode<synchronous>, transform_indices = @transform_3, window_bounds = array<i64: 8, 64>}, {transform_indices = @transform_4, window_bounds = array<i64: 1, 1>}, {transform_indices = @transform_5, window_bounds = array<i64: 1, 128>}]} {
    %c0 = arith.constant 0 : index
    %c0_0 = arith.constant 0 : index
    %0 = vector.load %arg2[%c0, %c0_0] : memref<64x32xf32, #tpu.memory_space<vmem>>, vector<64x32xf32>
    %c0_1 = arith.constant 0 : index
    %c0_2 = arith.constant 0 : index
    %1 = vector.load %arg1[%c0_1, %c0_2] : memref<128x32xf32, #tpu.memory_space<vmem>>, vector<128x32xf32>
    %cst = arith.constant dense<0.000000e+00> : vector<64x128xf32>
    %2 = tpu.matmul %0, %1, %cst {dimension_numbers = #tpu.dot_dimension_numbers<[1], [1], [0], [0], [0, 0, 1, 0], [], []>} : vector<64x32xf32>, vector<128x32xf32>, vector<64x128xf32> -> vector<64x128xf32>
    %c0_3 = arith.constant 0 : index
    %c0_4 = arith.constant 0 : index
    %3 = vector.load %arg3[%c0_3, %c0_4] : memref<64x1xf32, #tpu.memory_space<vmem>>, vector<64x1xf32>
    %4 = vector.broadcast %3 : vector<64x1xf32> to vector<64x128xf32>
    %5 = arith.addf %2, %4 : vector<64x128xf32>
    %cst_5 = arith.constant 0.000000e+00 : f32
    %6 = vector.broadcast %cst_5 : f32 to vector<64x128xf32>
    %7 = arith.maximumf %5, %6 : vector<64x128xf32>
    %c0_6 = arith.constant 0 : index
    %c0_7 = arith.constant 0 : index
    %8 = vector.load %arg4[%c0_6, %c0_7] : memref<8x64xf32, #tpu.memory_space<vmem>>, vector<8x64xf32>
    %cst_8 = arith.constant dense<0.000000e+00> : vector<8x128xf32>
    %9 = tpu.matmul %8, %7, %cst_8 {dimension_numbers = #tpu.dot_dimension_numbers<[1], [0], [0], [1], [0, 0, 1, 1], [], []>} : vector<8x64xf32>, vector<64x128xf32>, vector<8x128xf32> -> vector<8x128xf32>
    %10 = vector.extract_strided_slice %9 {offsets = [0, 0], sizes = [1, 128], strides = [1, 1]} : vector<8x128xf32> to vector<1x128xf32>
    %c0_9 = arith.constant 0 : index
    %c0_10 = arith.constant 0 : index
    %11 = memref.load %arg5[%c0_9, %c0_10] : memref<1x1xf32, #tpu.memory_space<smem>>
    %12 = vector.broadcast %11 : f32 to vector<1x128xf32>
    %13 = arith.addf %10, %12 : vector<1x128xf32>
    %c0_11 = arith.constant 0 : index
    %c0_12 = arith.constant 0 : index
    %14 = vector.load %arg6[%c0_11, %c0_12] : memref<1x128xf32, #tpu.memory_space<vmem>>, vector<1x128xf32>
    tpu.vector_store %arg6[%c0_11, %c0_12], %13 {strides = array<i32>} : memref<1x128xf32, #tpu.memory_space<vmem>>, vector<1x128xf32>,
    return
  }
  func.func @transform_0(%arg0: i32) -> (i32, i32) {
    %c0_i32 = arith.constant 0 : i32
    %c0_i32_0 = arith.constant 0 : i32
    return %arg0, %c0_i32 : i32, i32
  }
  func.func @transform_1(%arg0: i32) -> (i32, i32) {
    %c0_i32 = arith.constant 0 : i32
    %c0_i32_0 = arith.constant 0 : i32
    %c0_i32_1 = arith.constant 0 : i32
    return %c0_i32, %c0_i32_0 : i32, i32
  }
  func.func @transform_2(%arg0: i32) -> (i32, i32) {
    %c0_i32 = arith.constant 0 : i32
    %c0_i32_0 = arith.constant 0 : i32
    %c0_i32_1 = arith.constant 0 : i32
    return %c0_i32, %c0_i32_0 : i32, i32
  }
  func.func @transform_3(%arg0: i32) -> (i32, i32) {
    %c0_i32 = arith.constant 0 : i32
    %c0_i32_0 = arith.constant 0 : i32
    %c0_i32_1 = arith.constant 0 : i32
    return %c0_i32, %c0_i32_0 : i32, i32
  }
  func.func @transform_4(%arg0: i32) -> (i32, i32) {
    %c0_i32 = arith.constant 0 : i32
    %c0_i32_0 = arith.constant 0 : i32
    %c0_i32_1 = arith.constant 0 : i32
    return %c0_i32, %c0_i32_0 : i32, i32
  }
  func.func @transform_5(%arg0: i32) -> (i32, i32) {
    %c0_i32 = arith.constant 0 : i32
    %c0_i32_0 = arith.constant 0 : i32
    return %c0_i32, %arg0 : i32, i32
  }
}

</mosaic_0001>

<llo_original>
// kernel: tpu_custom_call.1
$region0: #{tpu_custom_call.1}
  #allocation0 [shape = 'u32[]', space=smem, size = 0x4, offset = 0x4, fixed_abs, tag = 'smem constant byte address 0x4 - core index']
  #allocation1 [shape = 'u32[144,128]{1,0:T(1,128)}', space=vmem, size = 0x12000, scoped, tag = 'internal scratch']
  #allocation2 [shape = 'f32[1,1]{1,0:T(1,128)S(6)}', space=smem, size = 0x200, scoped, tag = 'scoped memory for tpu_custom_call.1']
  %s0 = inlined_call_operand.vmem [shape: f32[128,32], index: 0, kind: input, shape index: {}]
  %s1 = inlined_call_operand.vmem [shape: f32[64,32], index: 1, kind: input, shape index: {}]
  %s2 = inlined_call_operand.vmem [shape: f32[64,1], index: 2, kind: input, shape index: {}]
  %s3 = inlined_call_operand.vmem [shape: f32[8,64], index: 3, kind: input, shape index: {}]
  %s4 = inlined_call_operand.<no memory space> [shape: f32[1,1], index: 4, kind: input, shape index: {}]
  %s5 = inlined_call_operand.hbm [shape: f32[1,128], index: 5, kind: output, shape index: {}]
  %s6 = sld [smem:[#allocation0]]
  $region30: #{tpu_custom_call.1} parent=0
    _
  %s8 = ssub.s32 1, %s6
  %s9 = scalar_select 0, %s8, %s6
  %10 = sst [smem:[#allocation2]] %s4
  $region1: #{tpu_custom_call.1} parent=0
    #allocation3 [shape = 'u8[512]{0}', space=vmem, size = 0x400, scoped, tag = 'output window, operand 0, single buffered']
    #allocation4 [shape = 's32[1]{0}', space=sflag, size = 0x4, scoped, tag = 'scoped memory for tpu_custom_call.1']
    %11 = vsyncpa [#allocation4], 0
    // Predicated region
    $region2: #{tpu_custom_call.1} parent=1 // pred_check
      _
    $region3: #{tpu_custom_call.1} parent=1 // pred_check_branch
      %13 = sbr.rel (0) target = $region5
    $region4: #{tpu_custom_call.1} parent=1 // pred_region
      _
    $region5: #{tpu_custom_call.1} parent=1 // pred_fallthru
      _
    // Predicated region
    $region6: #{tpu_custom_call.1} parent=1 // pred_check
      _
    $region7: #{tpu_custom_call.1} parent=1 // pred_check_branch
      %15 = sbr.rel (0) target = $region9
    $region8: #{tpu_custom_call.1} parent=1 // pred_region
      _
    $region9: #{tpu_custom_call.1} parent=1 // pred_fallthru
      _
    // Predicated region
    $region10: #{tpu_custom_call.1} parent=1 // pred_check
      _
    $region11: #{tpu_custom_call.1} parent=1 // pred_check_branch
      %17 = sbr.rel (0) target = $region13
    $region12: #{tpu_custom_call.1} parent=1 // pred_region
      _
    $region13: #{tpu_custom_call.1} parent=1 // pred_fallthru
      _
    // Predicated region
    $region14: #{tpu_custom_call.1} parent=1 // pred_check
      _
    $region15: #{tpu_custom_call.1} parent=1 // pred_check_branch
      %19 = sbr.rel (0) target = $region17
    $region16: #{tpu_custom_call.1} parent=1 // pred_region
      _
    $region17: #{tpu_custom_call.1} parent=1 // pred_fallthru
      _
    // Predicated region
    $region18: #{tpu_custom_call.1} parent=1 // pred_check
      _
    $region19: #{tpu_custom_call.1} parent=1 // pred_check_branch
      %21 = sbr.rel (0) target = $region21
    $region20: #{tpu_custom_call.1} parent=1 // pred_region
      _
    $region21: #{tpu_custom_call.1} parent=1 // pred_fallthru
      _
    %v22 = vld [vmem:[%s1] sm:$0xff]
    %v23 = vld [vmem:[%s1 + $0x8] sm:$0xff]
    %v24 = vld [vmem:[%s1 + $0x10] sm:$0xff]
    %v25 = vld [vmem:[%s1 + $0x18] sm:$0xff]
    %v26 = vld [vmem:[%s1 + $0x20] sm:$0xff]
    %v27 = vld [vmem:[%s1 + $0x28] sm:$0xff]
    %v28 = vld [vmem:[%s1 + $0x30] sm:$0xff]
    %v29 = vld [vmem:[%s1 + $0x38] sm:$0xff]
    %v30 = vld [vmem:[%s0] sm:$0xff]
    %v31 = vld [vmem:[%s0 + $0x8] sm:$0xff]
    %v32 = vld [vmem:[%s0 + $0x10] sm:$0xff]
    %v33 = vld [vmem:[%s0 + $0x18] sm:$0xff]
    %v34 = vld [vmem:[%s0 + $0x20] sm:$0xff]
    %v35 = vld [vmem:[%s0 + $0x28] sm:$0xff]
    %v36 = vld [vmem:[%s0 + $0x30] sm:$0xff]
    %v37 = vld [vmem:[%s0 + $0x38] sm:$0xff]
    %v38 = vld [vmem:[%s0 + $0x40] sm:$0xff]
    %v39 = vld [vmem:[%s0 + $0x48] sm:$0xff]
    %v40 = vld [vmem:[%s0 + $0x50] sm:$0xff]
    %v41 = vld [vmem:[%s0 + $0x58] sm:$0xff]
    %v42 = vld [vmem:[%s0 + $0x60] sm:$0xff]
    %v43 = vld [vmem:[%s0 + $0x68] sm:$0xff]
    %v44 = vld [vmem:[%s0 + $0x70] sm:$0xff]
    %v45 = vld [vmem:[%s0 + $0x78] sm:$0xff]
    %v46 = vld [vmem:[%s2] sm:$0xff]
    %v47 = vld [vmem:[%s2 + $0x8] sm:$0xff]
    %v48 = vld [vmem:[%s2 + $0x10] sm:$0xff]
    %v49 = vld [vmem:[%s2 + $0x18] sm:$0xff]
    %v50 = vld [vmem:[%s2 + $0x20] sm:$0xff]
    %v51 = vld [vmem:[%s2 + $0x28] sm:$0xff]
    %v52 = vld [vmem:[%s2 + $0x30] sm:$0xff]
    %v53 = vld [vmem:[%s2 + $0x38] sm:$0xff]
    %55 = vset.pattern.permute.xlu0 0
    %56 = vperm.xlu0 %55, %v46
    %v57 = vpop.permute.xlu0 %56
    %60 = vset.pattern.permute.xlu0 0
    %61 = vperm.xlu0 %60, %v47
    %v62 = vpop.permute.xlu0 %61
    %65 = vset.pattern.permute.xlu0 0
    %66 = vperm.xlu0 %65, %v48
    %v67 = vpop.permute.xlu0 %66
    %70 = vset.pattern.permute.xlu0 0
    %71 = vperm.xlu0 %70, %v49
    %v72 = vpop.permute.xlu0 %71
    %75 = vset.pattern.permute.xlu0 0
    %76 = vperm.xlu0 %75, %v50
    %v77 = vpop.permute.xlu0 %76
    %80 = vset.pattern.permute.xlu0 0
    %81 = vperm.xlu0 %80, %v51
    %v82 = vpop.permute.xlu0 %81
    %85 = vset.pattern.permute.xlu0 0
    %86 = vperm.xlu0 %85, %v52
    %v87 = vpop.permute.xlu0 %86
    %90 = vset.pattern.permute.xlu0 0
    %91 = vperm.xlu0 %90, %v53
    %v92 = vpop.permute.xlu0 %91
    %vm94 = vcmask 261120
    %v96 = vsel %vm94, %v22, 0
    %v99 = vsel %vm94, %v23, 0
    %v102 = vsel %vm94, %v24, 0
    %v105 = vsel %vm94, %v25, 0
    %v108 = vsel %vm94, %v26, 0
    %v111 = vsel %vm94, %v27, 0
    %v114 = vsel %vm94, %v28, 0
    %v117 = vsel %vm94, %v29, 0
    %v120 = vsel %vm94, %v30, 0
    %v123 = vsel %vm94, %v31, 0
    %v126 = vsel %vm94, %v32, 0
    %v129 = vsel %vm94, %v33, 0
    %v132 = vsel %vm94, %v34, 0
    %v135 = vsel %vm94, %v35, 0
    %v138 = vsel %vm94, %v36, 0
    %v141 = vsel %vm94, %v37, 0
    %v144 = vsel %vm94, %v38, 0
    %v147 = vsel %vm94, %v39, 0
    %v150 = vsel %vm94, %v40, 0
    %v153 = vsel %vm94, %v41, 0
    %v156 = vsel %vm94, %v42, 0
    %v159 = vsel %vm94, %v43, 0
    %v162 = vsel %vm94, %v44, 0
    %v165 = vsel %vm94, %v45, 0
    %167 = vmatprep.subr.mxu0 0.0
    %168 = vmatpush1.xpose.msra.mxu0 %v120
    %169 = vmatprep.subr.mxu0 0.0
    %170 = vmatpush1.xpose.msra.mxu0 %v123
    %171 = vmatprep.subr.mxu0 0.0
    %172 = vmatpush1.xpose.msra.mxu0 %v126
    %173 = vmatprep.subr.mxu0 0.0
    %174 = vmatpush1.xpose.msra.mxu0 %v129
    %175 = vmatprep.subr.mxu0 0.0
    %176 = vmatpush1.xpose.msra.mxu0 %v132
    %177 = vmatprep.subr.mxu0 0.0
    %178 = vmatpush1.xpose.msra.mxu0 %v135
    %179 = vmatprep.subr.mxu0 0.0
    %180 = vmatpush1.xpose.msra.mxu0 %v138
    %181 = vmatprep.subr.mxu0 0.0
    %182 = vmatpush1.xpose.msra.mxu0 %v141
    %183 = vmatprep.subr.mxu0 0.0
    %184 = vmatpush1.xpose.msra.mxu0 %v144
    %185 = vmatprep.subr.mxu0 0.0
    %186 = vmatpush1.xpose.msra.mxu0 %v147
    %187 = vmatprep.subr.mxu0 0.0
    %188 = vmatpush1.xpose.msra.mxu0 %v150
    %189 = vmatprep.subr.mxu0 0.0
    %190 = vmatpush1.xpose.msra.mxu0 %v153
    %191 = vmatprep.subr.mxu0 0.0
    %192 = vmatpush1.xpose.msra.mxu0 %v156
    %193 = vmatprep.subr.mxu0 0.0
    %194 = vmatpush1.xpose.msra.mxu0 %v159
    %195 = vmatprep.subr.mxu0 0.0
    %196 = vmatpush1.xpose.msra.mxu0 %v162
    %197 = vmatprep.subr.mxu0 0.0
    %198 = vmatpush1.xpose.msra.mxu0 %v165
    %199 = vmatprep.subr.mxu0 0.0
    %200 = vmatpush1.xpose.msra.mxu0 0.0
    %201 = vmatprep.subr.mxu0 0.0
    %202 = vmatpush1.xpose.msra.mxu0 0.0
    %203 = vmatprep.subr.mxu0 0.0
    %204 = vmatpush1.xpose.msra.mxu0 0.0
    %205 = vmatprep.subr.mxu0 0.0
    %206 = vmatpush1.xpose.msra.mxu0 0.0
    %207 = vmatprep.subr.mxu0 0.0
    %208 = vmatpush1.xpose.msra.mxu0 0.0
    %209 = vmatprep.subr.mxu0 0.0
    %210 = vmatpush1.xpose.msra.mxu0 0.0
    %211 = vmatprep.subr.mxu0 0.0
    %212 = vmatpush1.xpose.msra.mxu0 0.0
    %213 = vmatprep.subr.mxu0 0.0
    %214 = vmatpush1.xpose.msra.mxu0 0.0
    %215 = vmatprep.subr.mxu0 0.0
    %216 = vmatpush1.xpose.msra.mxu0 0.0
    %217 = vmatprep.subr.mxu0 0.0
    %218 = vmatpush1.xpose.msra.mxu0 0.0
    %219 = vmatprep.subr.mxu0 0.0
    %220 = vmatpush1.xpose.msra.mxu0 0.0
    %221 = vmatprep.subr.mxu0 0.0
    %222 = vmatpush1.xpose.msra.mxu0 0.0
    %223 = vmatprep.subr.mxu0 0.0
    %224 = vmatpush1.xpose.msra.mxu0 0.0
    %225 = vmatprep.subr.mxu0 0.0
    %226 = vmatpush1.xpose.msra.mxu0 0.0
    %227 = vmatprep.subr.mxu0 0.0
    %228 = vmatpush1.xpose.msra.mxu0 0.0
    %229 = vmatprep.subr.mxu0 0.0
    %230 = vmatpush1.xpose.msra.mxu0 0.0
    %231 = vmatprep.mubr.f32.mxu0 0.0
    %232 = vmatmul.mubr.f32.gmra.mrb[0].mxu0 %v96
    %v233 = vpop.f32.mrb[0].mxu0
    %v234 = vadd.f32 %v57, %v233
    %v235 = vpop.f32.mrb[0].mxu0
    %236 = vmatprep.mubr.f32.mxu0 0.0
    %237 = vmatmul.mubr.f32.gmra.mrb[0].mxu0 %v99
    %v238 = vpop.f32.mrb[0].mxu0
    %v239 = vadd.f32 %v62, %v238
    %v240 = vpop.f32.mrb[0].mxu0
    %241 = vmatprep.mubr.f32.mxu0 0.0
    %242 = vmatmul.mubr.f32.gmra.mrb[0].mxu0 %v102
    %v243 = vpop.f32.mrb[0].mxu0
    %v244 = vadd.f32 %v67, %v243
    %v245 = vpop.f32.mrb[0].mxu0
    %246 = vmatprep.mubr.f32.mxu0 0.0
    %247 = vmatmul.mubr.f32.gmra.mrb[0].mxu0 %v105
    %v248 = vpop.f32.mrb[0].mxu0
    %v249 = vadd.f32 %v72, %v248
    %v250 = vpop.f32.mrb[0].mxu0
    %251 = vmatprep.mubr.f32.mxu0 0.0
    %252 = vmatmul.mubr.f32.gmra.mrb[0].mxu0 %v108
    %v253 = vpop.f32.mrb[0].mxu0
    %v254 = vadd.f32 %v77, %v253
    %v255 = vpop.f32.mrb[0].mxu0
    %256 = vmatprep.mubr.f32.mxu0 0.0
    %257 = vmatmul.mubr.f32.gmra.mrb[0].mxu0 %v111
    %v258 = vpop.f32.mrb[0].mxu0
    %v259 = vadd.f32 %v82, %v258
    %v260 = vpop.f32.mrb[0].mxu0
    %261 = vmatprep.mubr.f32.mxu0 0.0
    %262 = vmatmul.mubr.f32.gmra.mrb[0].mxu0 %v114
    %v263 = vpop.f32.mrb[0].mxu0
    %v264 = vadd.f32 %v87, %v263
    %v265 = vpop.f32.mrb[0].mxu0
    %266 = vmatprep.mubr.f32.mxu0 0.0
    %267 = vmatmul.mubr.f32.gmra.mrb[0].mxu0 %v117
    %v268 = vpop.f32.mrb[0].mxu0
    %v269 = vadd.f32 %v92, %v268
    %v270 = vpop.f32.mrb[0].mxu0
    %271 = vdwg.mxu0
    %v272 = vmax.f32 %v234, 0.0
    %v273 = vmax.f32 %v239, 0.0
    %v274 = vmax.f32 %v244, 0.0
    %v275 = vmax.f32 %v249, 0.0
    %v276 = vmax.f32 %v254, 0.0
    %v277 = vmax.f32 %v259, 0.0
    %v278 = vmax.f32 %v264, 0.0
    %v279 = vmax.f32 %v269, 0.0
    %v280 = vld [vmem:[%s3] sm:$0xff]
    %vm281 = vcmask 523264
    %v283 = vsel %vm281, %v280, 0
    %285 = vmatprep.subr.mxu0 0.0
    %286 = vmatpush1.msra.mxu0 %v272
    %287 = vmatprep.subr.mxu0 0.0
    %288 = vmatpush1.msra.mxu0 %v273
    %289 = vmatprep.subr.mxu0 0.0
    %290 = vmatpush1.msra.mxu0 %v274
    %291 = vmatprep.subr.mxu0 0.0
    %292 = vmatpush1.msra.mxu0 %v275
    %293 = vmatprep.subr.mxu0 0.0
    %294 = vmatpush1.msra.mxu0 %v276
    %295 = vmatprep.subr.mxu0 0.0
    %296 = vmatpush1.msra.mxu0 %v277
    %297 = vmatprep.subr.mxu0 0.0
    %298 = vmatpush1.msra.mxu0 %v278
    %299 = vmatprep.subr.mxu0 0.0
    %300 = vmatpush1.msra.mxu0 %v279
    %301 = vmatprep.subr.mxu0 0.0
    %302 = vmatpush1.msra.mxu0 0.0
    %303 = vmatprep.subr.mxu0 0.0
    %304 = vmatpush1.msra.mxu0 0.0
    %305 = vmatprep.subr.mxu0 0.0
    %306 = vmatpush1.msra.mxu0 0.0
    %307 = vmatprep.subr.mxu0 0.0
    %308 = vmatpush1.msra.mxu0 0.0
    %309 = vmatprep.subr.mxu0 0.0
    %310 = vmatpush1.msra.mxu0 0.0
    %311 = vmatprep.subr.mxu0 0.0
    %312 = vmatpush1.msra.mxu0 0.0
    %313 = vmatprep.subr.mxu0 0.0
    %314 = vmatpush1.msra.mxu0 0.0
    %315 = vmatprep.subr.mxu0 0.0
    %316 = vmatpush1.msra.mxu0 0.0
    %317 = vmatprep.subr.mxu0 0.0
    %318 = vmatpush1.msra.mxu0 0.0
    %319 = vmatprep.subr.mxu0 0.0
    %320 = vmatpush1.msra.mxu0 0.0
    %321 = vmatprep.subr.mxu0 0.0
    %322 = vmatpush1.msra.mxu0 0.0
    %323 = vmatprep.subr.mxu0 0.0
    %324 = vmatpush1.msra.mxu0 0.0
    %325 = vmatprep.subr.mxu0 0.0
    %326 = vmatpush1.msra.mxu0 0.0
    %327 = vmatprep.subr.mxu0 0.0
    %328 = vmatpush1.msra.mxu0 0.0
    %329 = vmatprep.subr.mxu0 0.0
    %330 = vmatpush1.msra.mxu0 0.0
    %331 = vmatprep.subr.mxu0 0.0
    %332 = vmatpush1.msra.mxu0 0.0
    %333 = vmatprep.subr.mxu0 0.0
    %334 = vmatpush1.msra.mxu0 0.0
    %335 = vmatprep.subr.mxu0 0.0
    %336 = vmatpush1.msra.mxu0 0.0
    %337 = vmatprep.subr.mxu0 0.0
    %338 = vmatpush1.msra.mxu0 0.0
    %339 = vmatprep.subr.mxu0 0.0
    %340 = vmatpush1.msra.mxu0 0.0
    %341 = vmatprep.subr.mxu0 0.0
    %342 = vmatpush1.msra.mxu0 0.0
    %343 = vmatprep.subr.mxu0 0.0
    %344 = vmatpush1.msra.mxu0 0.0
    %345 = vmatprep.subr.mxu0 0.0
    %346 = vmatpush1.msra.mxu0 0.0
    %347 = vmatprep.subr.mxu0 0.0
    %348 = vmatpush1.msra.mxu0 0.0
    %349 = vmatprep.mubr.f32.mxu0 0.0
    %350 = vmatmul.mubr.f32.gmra.mrb[0].mxu0 %v283
    %v351 = vpop.f32.mrb[0].mxu0
    %v352 = vadd.f32 0.0, %v351
    %v353 = vpop.f32.mrb[0].mxu0
    %354 = vdwg.mxu0
    %s355 = sld [smem:[#allocation2]]
    %v356 = vstv %s355
    %v357 = vadd.f32 %v352, %v356
    %358 = vst [vmem:[#allocation3] sm:$0x1] %v357
    // Predicated region
    $region22: #{tpu_custom_call.1} parent=1 // pred_check
      _
    $region23: #{tpu_custom_call.1} parent=1 // pred_check_branch
      %360 = sbr.rel (0) target = $region25
    $region24: #{tpu_custom_call.1} parent=1 // pred_region
      %s362 = ssub.s32 16, 16
      %363 = vsyncadd [#allocation4], %s362
      %s365 = sshll.u32 [#allocation3], 4
      %s366 = int_to_ptr.vmem [resolvable:$true] %s365
      %368 = dma.vmem_to_hbm [thread:$0]  %s366, 16, %s5, [#allocation4]
    $region25: #{tpu_custom_call.1} parent=1 // pred_fallthru
      _
    // Predicated region
    $region26: #{tpu_custom_call.1} parent=1 // pred_check
      _
    $region27: #{tpu_custom_call.1} parent=1 // pred_check_branch
      %370 = sbr.rel (0) target = $region29
    $region28: #{tpu_custom_call.1} parent=1 // pred_region
      %371 = dma.done [#allocation4], 16
    $region29: #{tpu_custom_call.1} parent=1 // pred_fallthru
      _
    %372 = vsyncpa [#allocation4], 1

</llo_original>
